<compile_context>
chip_gen: v5e
topology: v5e:2x2
jax: 0.10.0
libtpu: 0.0.40
codegen_flags: <defaults>
</compile_context>

<pallas_src>
import jax
import jax.numpy as jnp
from jax.experimental import pallas as pl
from jax.experimental.pallas import tpu as pltpu


# Set to jnp.bfloat16 on v6e/v7x to run the 1x1-conv matmul at MXU-native bf16
# throughput (accumulation stays f32).  Default f32 matches PyTorch numerics.
MATMUL_DTYPE = jnp.float32


def _bn_stats_kernel(img_ref, sum_ref, gram_ref):
    """Accumulate per-channel sum and channel-channel Gram matrix of img.

    img_ref block: (1, ic, TN) NCW tile.  Both outputs map to block (0, 0) for
    every grid point, so they stay VMEM-resident and act as accumulators.
    """
    @pl.when(jnp.logical_and(pl.program_id(0) == 0, pl.program_id(1) == 0))
    def _():
        sum_ref[...] = jnp.zeros_like(sum_ref)
        gram_ref[...] = jnp.zeros_like(gram_ref)

    x = img_ref[0].astype(jnp.float32)                                     # (ic, TN)
    sum_ref[...] += jnp.sum(x, axis=-1, keepdims=True)                     # (ic, 1)
    gram_ref[...] += jnp.dot(x, x.T, preferred_element_type=jnp.float32)   # (ic, ic)


def _conv_bn_relu_kernel(img_ref, wc_ref, scale_ref, shift_ref, out_ref):
    """out = ReLU(BN(conv1x1(img))) * att, with att == 1.0 const-folded.

    img_ref:   (1, ic, TN)  NCW tile (N on the lane axis -> lane-dense store)
    wc_ref:    (pc, ic)     Conv1d(ic, pc, 1) weight
    scale_ref: (pc, 1)      gamma * rsqrt(var + eps)
    shift_ref: (pc, 1)      beta - mean_conv_nobias * scale  (bias bc cancels)
    out_ref:   (1, pc, TN)
    """
    x = img_ref[0]
    w = wc_ref[...]
    if MATMUL_DTYPE != jnp.float32:
        x = x.astype(MATMUL_DTYPE)
        w = w.astype(MATMUL_DTYPE)
    conv = jnp.dot(w, x, preferred_element_type=jnp.float32)               # (pc, TN)
    y = jnp.maximum(conv * scale_ref[...] + shift_ref[...], 0.0)           # BN affine + ReLU
    out_ref[0] = y.astype(out_ref.dtype)


def _pick_tile_n(n):
    for tn in (512, 256, 128):
        if n % tn == 0:
            return tn
    return n  # full-extent lane block (only for tiny / odd N)


def ia_layer_forward(img_feas, point_feas, params, *, eps=1e-5):
    """IA_Layer forward, PyTorch NCW layout in and out.

    img_feas:   (B, ic, N)
    point_feas: (B, pc, N) — unused: gumbel_softmax over the size-1 logit axis
                is identically 1.0, so fc1/fc2/fc3 (and point_feas) provably
                cannot influence the output.
    returns:    (B, pc, N)
    """
    del point_feas  # attention branch const-folds to 1.0 (see docstring)

    B, ic, N = img_feas.shape
    wc = params["wc"]                          # (pc, ic)
    pc = wc.shape[0]
    TN = _pick_tile_n(N)
    nN = N // TN
    M = B * N

    # ---- pass 1: streaming per-channel sum + Gram matrix of img -------------
    sum_x, gram = pl.pallas_call(
        _bn_stats_kernel,
        out_shape=(jax.ShapeDtypeStruct((ic, 1), jnp.float32),
                   jax.ShapeDtypeStruct((ic, ic), jnp.float32)),
        grid=(B, nN),
        in_specs=[pl.BlockSpec((1, ic, TN), lambda b, n: (b, 0, n))],
        out_specs=(pl.BlockSpec((ic, 1), lambda b, n: (0, 0)),
                   pl.BlockSpec((ic, ic), lambda b, n: (0, 0))),
        compiler_params=pltpu.CompilerParams(
            dimension_semantics=("arbitrary", "arbitrary")),
    )(img_feas)

    # ---- tiny per-channel finalize (O(pc*ic), plain JAX) ---------------------
    # conv is linear in img, so BN training-mode batch stats of conv follow
    # analytically from (mean, covariance) of img:
    #   mean_conv = wc @ mean_img + bc,   var_conv_p = wc_p^T Cov(img) wc_p
    # The conv bias bc cancels exactly in (conv - mean_conv), so it never
    # appears in the folded affine (same as the PyTorch forward).
    mean_x = sum_x / M                                                     # (ic, 1)
    cov = gram / M - mean_x @ mean_x.T                                     # (ic, ic)
    mean_nb = wc @ mean_x                                                  # (pc, 1)
    var = jnp.maximum(jnp.sum((wc @ cov) * wc, axis=1, keepdims=True), 0.0)
    scale = params["gamma"][:, None] * jax.lax.rsqrt(var + eps)            # (pc, 1)
    shift = params["beta"][:, None] - mean_nb * scale                      # (pc, 1)

    # ---- pass 2: conv1x1 + folded BN affine + ReLU (tiled, megacore-parallel)
    out = pl.pallas_call(
        _conv_bn_relu_kernel,
        out_shape=jax.ShapeDtypeStruct((B, pc, N), img_feas.dtype),
        grid=(B, nN),
        in_specs=[pl.BlockSpec((1, ic, TN), lambda b, n: (b, 0, n)),
                  pl.BlockSpec((pc, ic), lambda b, n: (0, 0)),
                  pl.BlockSpec((pc, 1), lambda b, n: (0, 0)),
                  pl.BlockSpec((pc, 1), lambda b, n: (0, 0))],
        out_specs=pl.BlockSpec((1, pc, TN), lambda b, n: (b, 0, n)),
        compiler_params=pltpu.CompilerParams(
            dimension_semantics=("parallel", "parallel")),
    )(img_feas, wc, scale, shift)
    return out


def _reference_forward(img_feas, params, eps=1e-5):
    """Pure-JAX reference: conv1x1 -> BN (batch stats) -> ReLU -> *1.0."""
    conv = jnp.einsum("pc,bcn->bpn", params["wc"], img_feas) \
        + params["bc"][None, :, None]
    mean = jnp.mean(conv, axis=(0, 2), keepdims=True)
    var = jnp.mean((conv - mean) ** 2, axis=(0, 2), keepdims=True)
    y = (conv - mean) * jax.lax.rsqrt(var + eps)
    y = y * params["gamma"][None, :, None] + params["beta"][None, :, None]
    return jnp.maximum(y, 0.0)


if __name__ == "__main__":
    # channels = (ic, pc) as in IA_Layer.__init__; rc = pc // 4
    B, ic, pc, N = 2, 32, 64, 512
    rc = pc // 4

    key = jax.random.PRNGKey(0)
    keys = jax.random.split(key, 10)

    img_feas = jax.random.normal(keys[0], (B, ic, N), dtype=jnp.float32)
    point_feas = jax.random.normal(keys[1], (B, pc, N), dtype=jnp.float32)

    params = {
        # conv1: Conv1d(ic, pc, 1) weight / bias (PyTorch shapes, kernel dim squeezed)
        "wc": 0.1 * jax.random.normal(keys[2], (pc, ic), jnp.float32),
        "bc": 0.1 * jax.random.normal(keys[3], (pc,), jnp.float32),
        # bn1: BatchNorm1d(pc) affine params (training mode, batch statistics)
        "gamma": jnp.ones((pc,), jnp.float32),
        "beta": jnp.zeros((pc,), jnp.float32),
        # fc1/fc2/fc3 of the attention branch — kept only for state-dict parity;
        # gumbel_softmax over the size-1 logit axis is identically 1.0, so they
        # cannot change the forward output.
        "w1": 0.1 * jax.random.normal(keys[4], (rc, ic), jnp.float32),
        "b1": 0.1 * jax.random.normal(keys[5], (rc,), jnp.float32),
        "w2": 0.1 * jax.random.normal(keys[6], (rc, pc), jnp.float32),
        "b2": 0.1 * jax.random.normal(keys[7], (rc,), jnp.float32),
        "w3": 0.1 * jax.random.normal(keys[8], (1, rc), jnp.float32),
        "b3": 0.1 * jax.random.normal(keys[9], (1,), jnp.float32),
    }

    out = jax.block_until_ready(ia_layer_forward(img_feas, point_feas, params))
    assert out.shape == (B, pc, N) and out.dtype == jnp.float32

    ref = jax.block_until_ready(_reference_forward(img_feas, params))
    assert jnp.allclose(out, ref, rtol=1e-2, atol=1e-3), "mismatch vs pure-JAX reference"

    print("KERNEL_OK")
</pallas_src>

<mosaic_0001>
module attributes {stable_mosaic.version = 11 : i64} {
  func.func @_bn_stats_kernel(%arg0: i32, %arg1: i32, %arg2: memref<1x32x512xf32, #tpu.memory_space<vmem>>, %arg3: memref<32x1xf32, #tpu.memory_space<vmem>>, %arg4: memref<32x32xf32, #tpu.memory_space<vmem>>) attributes {dimension_semantics = [#tpu.dimension_semantics<arbitrary>, #tpu.dimension_semantics<arbitrary>], iteration_bounds = array<i64: 2, 1>, scalar_prefetch = 0 : i64, scratch_operands = 0 : i64, tpu.core_type = #tpu.core_type<tc>, window_params = [{transform_indices = @transform_0, window_bounds = array<i64: 1, 32, 512>}, {pipeline_mode = #tpu.pipeline_mode<synchronous>, transform_indices = @transform_1, window_bounds = array<i64: 32, 1>}, {pipeline_mode = #tpu.pipeline_mode<synchronous>, transform_indices = @transform_2, window_bounds = array<i64: 32, 32>}]} {
    %c0_i32 = arith.constant 0 : i32
    %0 = arith.cmpi eq, %arg0, %c0_i32 : i32
    %c0_i32_0 = arith.constant 0 : i32
    %1 = arith.cmpi eq, %arg1, %c0_i32_0 : i32
    %2 = arith.andi %0, %1 : i1
    %3 = arith.extui %2 : i1 to i32
    %c0_i32_1 = arith.constant 0 : i32
    %4 = arith.cmpi ne, %3, %c0_i32_1 : i32
    scf.if %4 {
      %cst_13 = arith.constant 0.000000e+00 : f32
      %17 = vector.broadcast %cst_13 : f32 to vector<32x1xf32>
      %c0_14 = arith.constant 0 : index
      %c0_15 = arith.constant 0 : index
      %18 = vector.load %arg3[%c0_14, %c0_15] : memref<32x1xf32, #tpu.memory_space<vmem>>, vector<32x1xf32>
      tpu.vector_store %arg3[%c0_14, %c0_15], %17 {strides = array<i32>} : memref<32x1xf32, #tpu.memory_space<vmem>>, vector<32x1xf32>,
      %cst_16 = arith.constant 0.000000e+00 : f32
      %19 = vector.broadcast %cst_16 : f32 to vector<32x32xf32>
      %c0_17 = arith.constant 0 : index
      %c0_18 = arith.constant 0 : index
      %20 = vector.load %arg4[%c0_17, %c0_18] : memref<32x32xf32, #tpu.memory_space<vmem>>, vector<32x32xf32>
      tpu.vector_store %arg4[%c0_17, %c0_18], %19 {strides = array<i32>} : memref<32x32xf32, #tpu.memory_space<vmem>>, vector<32x32xf32>,
    } else {
    }
    %c0 = arith.constant 0 : index
    %c0_2 = arith.constant 0 : index
    %c0_3 = arith.constant 0 : index
    %5 = vector.load %arg2[%c0, %c0_2, %c0_3] : memref<1x32x512xf32, #tpu.memory_space<vmem>>, vector<1x32x512xf32>
    %6 = vector.shape_cast %5 : vector<1x32x512xf32> to vector<32x512xf32>
    %c0_4 = arith.constant 0 : index
    %c0_5 = arith.constant 0 : index
    %7 = vector.load %arg3[%c0_4, %c0_5] : memref<32x1xf32, #tpu.memory_space<vmem>>, vector<32x1xf32>
    %cst = arith.constant dense<0.000000e+00> : vector<32xf32>
    %8 = vector.multi_reduction <add>, %6, %cst [1] : vector<32x512xf32> to vector<32xf32>
    %9 = vector.shape_cast %8 : vector<32xf32> to vector<32x1xf32>
    %10 = arith.addf %7, %9 : vector<32x1xf32>
    %c0_6 = arith.constant 0 : index
    %c0_7 = arith.constant 0 : index
    %11 = vector.load %arg3[%c0_6, %c0_7] : memref<32x1xf32, #tpu.memory_space<vmem>>, vector<32x1xf32>
    tpu.vector_store %arg3[%c0_6, %c0_7], %10 {strides = array<i32>} : memref<32x1xf32, #tpu.memory_space<vmem>>, vector<32x1xf32>,
    %c0_8 = arith.constant 0 : index
    %c0_9 = arith.constant 0 : index
    %12 = vector.load %arg4[%c0_8, %c0_9] : memref<32x32xf32, #tpu.memory_space<vmem>>, vector<32x32xf32>
    %13 = tpu.transpose %6, [1, 0] : vector<32x512xf32> -> vector<512x32xf32>
    %cst_10 = arith.constant dense<0.000000e+00> : vector<32x32xf32>
    %14 = tpu.matmul %6, %13, %cst_10 {dimension_numbers = #tpu.dot_dimension_numbers<[1], [0], [0], [1], [0, 0, 1, 1], [], []>} : vector<32x512xf32>, vector<512x32xf32>, vector<32x32xf32> -> vector<32x32xf32>
    %15 = arith.addf %12, %14 : vector<32x32xf32>
    %c0_11 = arith.constant 0 : index
    %c0_12 = arith.constant 0 : index
    %16 = vector.load %arg4[%c0_11, %c0_12] : memref<32x32xf32, #tpu.memory_space<vmem>>, vector<32x32xf32>
    tpu.vector_store %arg4[%c0_11, %c0_12], %15 {strides = array<i32>} : memref<32x32xf32, #tpu.memory_space<vmem>>, vector<32x32xf32>,
    return
  }
  func.func @transform_0(%arg0: i32, %arg1: i32) -> (i32, i32, i32) {
    %c0_i32 = arith.constant 0 : i32
    %c0_i32_0 = arith.constant 0 : i32
    return %arg0, %c0_i32, %arg1 : i32, i32, i32
  }
  func.func @transform_1(%arg0: i32, %arg1: i32) -> (i32, i32) {
    %c0_i32 = arith.constant 0 : i32
    %c0_i32_0 = arith.constant 0 : i32
    %c0_i32_1 = arith.constant 0 : i32
    return %c0_i32, %c0_i32_0 : i32, i32
  }
  func.func @transform_2(%arg0: i32, %arg1: i32) -> (i32, i32) {
    %c0_i32 = arith.constant 0 : i32
    %c0_i32_0 = arith.constant 0 : i32
    %c0_i32_1 = arith.constant 0 : i32
    return %c0_i32, %c0_i32_0 : i32, i32
  }
}

</mosaic_0001>

<llo_original>
// kernel: tpu_custom_call.1
$region0: #{tpu_custom_call.1}
  #allocation0 [shape = 'u32[]', space=smem, size = 0x4, offset = 0x4, fixed_abs, tag = 'smem constant byte address 0x4 - core index']
  #allocation1 [shape = 'u32[72,128]{1,0:T(1,128)}', space=vmem, size = 0x9000, scoped, tag = 'internal scratch']
  %s0 = inlined_call_operand.hbm [shape: f32[2,32,512], index: 0, kind: input, shape index: {}]
  %s1 = inlined_call_operand.vmem [shape: f32[32,1], index: 1, kind: output, shape index: {0}]
  %s2 = inlined_call_operand.hbm [shape: f32[32,32], index: 2, kind: output, shape index: {1}]
  %3 = xla_tuple %s1, %s2
  %s4 = sld [smem:[#allocation0]]
  $region53: #{tpu_custom_call.1} parent=0
    _
  %s6 = ssub.s32 1, %s4
  %s7 = scalar_select 0, %s6, %s4
  $region1: #{tpu_custom_call.1} parent=0
    #allocation2 [shape = 'u8[131072]{0}', space=vmem, size = 0x20000, scoped, tag = 'input window, operand 0']
    #allocation3 [shape = 's32[2]{0}', space=sflag, size = 0x8, scoped, tag = 'scoped memory for tpu_custom_call.1']
    #allocation4 [shape = 's32[2]{0}', space=sflag, size = 0x8, scoped, tag = 'scoped memory for tpu_custom_call.1']
    #allocation5 [shape = 'u8[16384]{0}', space=vmem, size = 0x4000, scoped, tag = 'output window, operand 1, single buffered']
    %8 = vsyncpa [#allocation3], 0
    %s9 = scalar_lea.sflag [#allocation3], 1
    %10 = vsyncpa %s9, 0
    %11 = vsyncpa [#allocation4], 0
    loop: start=0, step=1, limit=4
    $region2: #{tpu_custom_call.1} parent=1 // loop_pre_header
      _
    $region3: #{tpu_custom_call.1} parent=1 // loop_header
      %s13 = sphi 0, %s17
      %p14 = scmp.ge.s32.totalorder %s13, 4
      %s20 = sphi 0, %s32
      %s21 = sphi 0, %s28
      %s22 = sphi 0, %s20
      %s23 = sphi 0, %s21
      %s24 = sphi 0, %s22
      %s25 = sphi 0, %s23
      %s37 = sphi 0, %s39
      %s40 = sphi 0, %s37
      %s41 = sphi 0, %s40
      %s57 = sphi 0, %s41
      %s61 = sphi 0, %s61
      %s63 = sphi 0, %s61
      %s64 = sphi 0, %s63
      %s78 = sphi 0, %s64
      %s82 = sphi 0, %s82
      %s84 = sphi 0, %s82
      %s85 = sphi 0, %s84
      %s99 = sphi 0, %s85
    $region4: #{tpu_custom_call.1} parent=1 // loop_header_branch
      %16 = sbr.rel (%p14) target = $region8
    $region5: #{tpu_custom_call.1} parent=1 // loop_body
      %s18 = ssub.s32 %s13, 1
      %s19 = ssub.s32 %s13, 2
      %s26 = sadd.s32 1, %s21
      %p27 = scmp.ge.s32.totalorder %s26, 1
      %s28 = scalar_select %p27, 0, %s26
      %s29 = sadd.s32 1, %s20
      %s30 = scalar_select %p27, %s29, %s20
      %p31 = scmp.ge.s32.totalorder %s30, 2
      %s32 = scalar_select %p31, 0, %s30
      %s33 = ssub.s32 %s20, %s32
      %s34 = ssub.s32 %s21, %s28
      %s35 = sor.u32 %s33, %s34
      %p36 = scmp.eq.s32.totalorder %s35, 0
      %s38 = sadd.s32 %s37, 1
      %s39 = scalar_select %p36, %s37, %s38
      %p42 = pneg %p36
      %p43 = scmp.eq.s32.totalorder %s13, 1
      %p44 = por %p42, %p43
      %p45 = scmp.ne.s32.totalorder %s37, %s40
      %p46 = scmp.eq.s32.totalorder %s13, 0
      %p47 = por %p45, %p46
      %p48 = scmp.ne.s32.totalorder %s37, %s40
      %p49 = scmp.eq.s32.totalorder %s18, 1
      %p50 = por %p48, %p49
      %p51 = scmp.ne.s32.totalorder %s40, %s41
      %p52 = scmp.eq.s32.totalorder %s18, 0
      %p53 = por %p51, %p52
      %p54 = scmp.ne.s32.totalorder %s40, %s41
      %p55 = scmp.eq.s32.totalorder %s19, 1
      %p56 = por %p54, %p55
      %p58 = scmp.ne.s32.totalorder %s41, %s57
      %p59 = scmp.eq.s32.totalorder %s19, 0
      %p60 = por %p58, %p59
      %s62 = sadd.s32 %s61, 1
      %p65 = scmp.eq.s32.totalorder %s13, 1
      %p66 = scmp.ne.s32.totalorder %s61, %s63
      %p67 = scmp.eq.s32.totalorder %s13, 0
      %p68 = por %p66, %p67
      %p69 = scmp.ne.s32.totalorder %s61, %s63
      %p70 = scmp.eq.s32.totalorder %s18, 1
      %p71 = por %p69, %p70
      %p72 = scmp.ne.s32.totalorder %s63, %s64
      %p73 = scmp.eq.s32.totalorder %s18, 0
      %p74 = por %p72, %p73
      %p75 = scmp.ne.s32.totalorder %s63, %s64
      %p76 = scmp.eq.s32.totalorder %s19, 1
      %p77 = por %p75, %p76
      %p79 = scmp.ne.s32.totalorder %s64, %s78
      %p80 = scmp.eq.s32.totalorder %s19, 0
      %p81 = por %p79, %p80
      %s83 = sadd.s32 %s82, 1
      %p86 = scmp.eq.s32.totalorder %s13, 1
      %p87 = scmp.ne.s32.totalorder %s82, %s84
      %p88 = scmp.eq.s32.totalorder %s13, 0
      %p89 = por %p87, %p88
      %p90 = scmp.ne.s32.totalorder %s82, %s84
      %p91 = scmp.eq.s32.totalorder %s18, 1
      %p92 = por %p90, %p91
      %p93 = scmp.ne.s32.totalorder %s84, %s85
      %p94 = scmp.eq.s32.totalorder %s18, 0
      %p95 = por %p93, %p94
      %p96 = scmp.ne.s32.totalorder %s84, %s85
      %p97 = scmp.eq.s32.totalorder %s19, 1
      %p98 = por %p96, %p97
      %p100 = scmp.ne.s32.totalorder %s85, %s99
      %p101 = scmp.eq.s32.totalorder %s19, 0
      %p102 = por %p100, %p101
      %p103 = scmp.le.s32.totalorder 1, %s13
      %p104 = scmp.lt.s32.totalorder %s13, 3
      %p105 = pnand %p103, %p104
      %p106 = pneg %p105
      // Predicated region
      $region9: #{tpu_custom_call.1} parent=5 // pred_check
        _
      $region10: #{tpu_custom_call.1} parent=5 // pred_check_branch
        %108 = sbr.rel (%p105) target = $region12
      $region11: #{tpu_custom_call.1} parent=5 // pred_region
        %s109 = ssub.s32 %s13, 1
      $region12: #{tpu_custom_call.1} parent=5 // pred_fallthru
        _
      %p110 = scmp.lt.s32.totalorder %s13, 2
      // Predicated region
      $region13: #{tpu_custom_call.1} parent=5 // pred_check
        %p111 = pneg %p110
      $region14: #{tpu_custom_call.1} parent=5 // pred_check_branch
        %113 = sbr.rel (%p111) target = $region16
      $region15: #{tpu_custom_call.1} parent=5 // pred_region
        // Predicated region
        $region17: #{tpu_custom_call.1} parent=15 // pred_check
          %p114 = pneg %p47
        $region18: #{tpu_custom_call.1} parent=15 // pred_check_branch
          %116 = sbr.rel (%p114) target = $region20
        $region19: #{tpu_custom_call.1} parent=15 // pred_region
          %s117 = sand.u32 %s37, 1
          %s118 = scalar_lea.sflag [#allocation3], %s117
          %s119 = sand.u32 %s37, 1
          %s120 = smul.addr %s119, 128
          %s121 = scalar_lea.vmem [#allocation2], %s120
          %s122 = smul.u32 4, %s21
          %124 = vsyncadd %s118, 0
          %s125 = smul.addr %s20, 16
          %s126 = sadd.s32 %s122, %s125
          %s127 = smul.addr %s126, 8
          %s128 = scalar_lea.hbm %s0, %s127
          %s129 = sshll.u32 %s128, 4
          %s130 = int_to_ptr.hbm [resolvable:$true] %s129
          %s131 = sshll.u32 %s121, 4
          %s132 = int_to_ptr.vmem [resolvable:$true] %s131
          %137 = dma.hbm_to_vmem [thread:$0]  %s130, 2048, %s132, %s118, 512, 512, 32
        $region20: #{tpu_custom_call.1} parent=15 // pred_fallthru
          _
      $region16: #{tpu_custom_call.1} parent=5 // pred_fallthru
        _
      %p138 = scmp.le.s32.totalorder 1, %s13
      %p139 = scmp.lt.s32.totalorder %s13, 3
      %p140 = pnand %p138, %p139
      %p141 = pneg %p140
      // Predicated region
      $region21: #{tpu_custom_call.1} parent=5 // pred_check
        _
      $region22: #{tpu_custom_call.1} parent=5 // pred_check_branch
        %143 = sbr.rel (%p140) target = $region24
      $region23: #{tpu_custom_call.1} parent=5 // pred_region
        %s144 = ssub.s32 %s13, 1
        %s145 = sand.u32 %s40, 1
        %s146 = scalar_lea.sflag [#allocation3], %s145
        %s147 = sand.u32 %s40, 1
        %s148 = smul.addr %s147, 128
        %s149 = scalar_lea.vmem [#allocation2], %s148
        // Predicated region
        $region25: #{tpu_custom_call.1} parent=23 // pred_check
          %p150 = pneg %p53
        $region26: #{tpu_custom_call.1} parent=23 // pred_check_branch
          %152 = sbr.rel (%p150) target = $region28
        $region27: #{tpu_custom_call.1} parent=23 // pred_region
          %154 = dma.done %s146, 2048
        $region28: #{tpu_custom_call.1} parent=23 // pred_fallthru
          _
        %s155 = sand.u32 %s40, 1
        %s156 = scalar_lea.sflag [#allocation3], %s155
        %s157 = sand.u32 %s40, 1
        %s158 = smul.addr %s157, 128
        %s159 = scalar_lea.vmem [#allocation2], %s158
        %p160 = pneg %p53
        %p161 = pneg %p50
        %p162 = pneg %p74
        %p163 = pneg %p71
        %p164 = pneg %p95
        %p165 = pneg %p92
        %s166 = smul.u32 4, %s23
        %p167 = scmp.eq.s32.totalorder %s22, 0
        %p168 = scmp.eq.s32.totalorder %s23, 0
        %p169 = pnand %p167, %p168
        %p170 = pneg %p169
        // Predicated region
        $region29: #{tpu_custom_call.1} parent=23 // pred_check
          _
        $region30: #{tpu_custom_call.1} parent=23 // pred_check_branch
          %172 = sbr.rel (%p169) target = $region32
        $region31: #{tpu_custom_call.1} parent=23 // pred_region
          %vm173 = vcmask 7168
          %174 = vst.msk [vmem:[%s1] sm:$0xff] %vm173, 0.0
          %175 = vst.msk [vmem:[%s1 + $0x8] sm:$0xff] %vm173, 0.0
          %176 = vst.msk [vmem:[%s1 + $0x10] sm:$0xff] %vm173, 0.0
          %177 = vst.msk [vmem:[%s1 + $0x18] sm:$0xff] %vm173, 0.0
          %vm178 = vcmask 261120
          %179 = vst.msk [vmem:[#allocation5] sm:$0xff] %vm178, 0.0
          %180 = vst.msk [vmem:[#allocation5 + $0x8] sm:$0xff] %vm178, 0.0
          %181 = vst.msk [vmem:[#allocation5 + $0x10] sm:$0xff] %vm178, 0.0
          %182 = vst.msk [vmem:[#allocation5 + $0x18] sm:$0xff] %vm178, 0.0
        $region32: #{tpu_custom_call.1} parent=23 // pred_fallthru
          _
        %v183 = vld [vmem:[%s149] sm:$0xff]
        %v184 = vld [vmem:[%s149 + $0x8] sm:$0xff]
        %v185 = vld [vmem:[%s149 + $0x10] sm:$0xff]
        %v186 = vld [vmem:[%s149 + $0x18] sm:$0xff]
        %v187 = vld [vmem:[%s149 + $0x20] sm:$0xff]
        %v188 = vld [vmem:[%s149 + $0x28] sm:$0xff]
        %v189 = vld [vmem:[%s149 + $0x30] sm:$0xff]
        %v190 = vld [vmem:[%s149 + $0x38] sm:$0xff]
        %v191 = vld [vmem:[%s149 + $0x40] sm:$0xff]
        %v192 = vld [vmem:[%s149 + $0x48] sm:$0xff]
        %v193 = vld [vmem:[%s149 + $0x50] sm:$0xff]
        %v194 = vld [vmem:[%s149 + $0x58] sm:$0xff]
        %v195 = vld [vmem:[%s149 + $0x60] sm:$0xff]
        %v196 = vld [vmem:[%s149 + $0x68] sm:$0xff]
        %v197 = vld [vmem:[%s149 + $0x70] sm:$0xff]
        %v198 = vld [vmem:[%s149 + $0x78] sm:$0xff]
        %v199 = vld [vmem:[%s1] sm:$0xff]
        %v200 = vld [vmem:[%s1 + $0x8] sm:$0xff]
        %v201 = vld [vmem:[%s1 + $0x10] sm:$0xff]
        %v202 = vld [vmem:[%s1 + $0x18] sm:$0xff]
        %v203 = vadd.f32 %v183, %v184
        %v204 = vadd.f32 %v203, %v185
        %v205 = vadd.f32 %v204, %v186
        %206 = vadd.xlane.f32.xlu0 %v205
        %v207 = vpop.xlane.xlu0 %206
        %v208 = vadd.f32 %v187, %v188
        %v209 = vadd.f32 %v208, %v189
        %v210 = vadd.f32 %v209, %v190
        %211 = vadd.xlane.f32.xlu0 %v210
        %v212 = vpop.xlane.xlu0 %211
        %v213 = vadd.f32 %v191, %v192
        %v214 = vadd.f32 %v213, %v193
        %v215 = vadd.f32 %v214, %v194
        %216 = vadd.xlane.f32.xlu0 %v215
        %v217 = vpop.xlane.xlu0 %216
        %v218 = vadd.f32 %v195, %v196
        %v219 = vadd.f32 %v218, %v197
        %v220 = vadd.f32 %v219, %v198
        %221 = vadd.xlane.f32.xlu0 %v220
        %v222 = vpop.xlane.xlu0 %221
        %v223 = vadd.f32 %v199, %v207
        %v224 = vadd.f32 %v200, %v212
        %v225 = vadd.f32 %v201, %v217
        %v226 = vadd.f32 %v202, %v222
        %vm227 = vcmask 7168
        %228 = vst.msk [vmem:[%s1] sm:$0xff] %vm227, %v223
        %229 = vst.msk [vmem:[%s1 + $0x8] sm:$0xff] %vm227, %v224
        %230 = vst.msk [vmem:[%s1 + $0x10] sm:$0xff] %vm227, %v225
        %231 = vst.msk [vmem:[%s1 + $0x18] sm:$0xff] %vm227, %v226
        %v232 = vld [vmem:[#allocation5] sm:$0xff]
        %v233 = vld [vmem:[#allocation5 + $0x8] sm:$0xff]
        %v234 = vld [vmem:[#allocation5 + $0x10] sm:$0xff]
        %v235 = vld [vmem:[#allocation5 + $0x18] sm:$0xff]
        %236 = vmatpush.xpose.msra.mxu0 0.0
        %237 = vmatpush.xpose.msra.mxu0 0.0
        %238 = vmatpush.xpose.msra.mxu0 0.0
        %239 = vmatpush.xpose.msra.mxu0 0.0
        %240 = vmatpush.xpose.msra.mxu0 0.0
        %241 = vmatpush.xpose.msra.mxu0 0.0
        %242 = vmatpush.xpose.msra.mxu0 0.0
        %243 = vmatpush.xpose.msra.mxu0 0.0
        %244 = vmatpush.xpose.msra.mxu0 0.0
        %245 = vmatpush.xpose.msra.mxu0 0.0
        %246 = vmatpush.xpose.msra.mxu0 0.0
        %247 = vmatpush.xpose.msra.mxu0 0.0
        %248 = vmatpush.xpose.msra.mxu0 %v195
        %249 = vmatpush.xpose.msra.mxu0 %v191
        %250 = vmatpush.xpose.msra.mxu0 %v187
        %251 = vmatpush.xpose.msra.mxu0 %v183
        %252 = vmatmul.f32.gmra.mxu0 %v183
        %v253 = vpop.f32.mrf.mxu0
        %v254 = vadd.f32 0.0, %v253
        %255 = vmatmul.f32.gmra.mxu0 %v187
        %v256 = vpop.f32.mrf.mxu0
        %v257 = vadd.f32 0.0, %v256
        %258 = vmatmul.f32.gmra.mxu0 %v191
        %v259 = vpop.f32.mrf.mxu0
        %v260 = vadd.f32 0.0, %v259
        %261 = vmatmul.f32.gmra.mxu0 %v195
        %v262 = vpop.f32.mrf.mxu0
        %v263 = vadd.f32 0.0, %v262
        %264 = vdwg.mxu0
        %265 = vmatpush.xpose.msra.mxu0 0.0
        %266 = vmatpush.xpose.msra.mxu0 0.0
        %267 = vmatpush.xpose.msra.mxu0 0.0
        %268 = vmatpush.xpose.msra.mxu0 0.0
        %269 = vmatpush.xpose.msra.mxu0 0.0
        %270 = vmatpush.xpose.msra.mxu0 0.0
        %271 = vmatpush.xpose.msra.mxu0 0.0
        %272 = vmatpush.xpose.msra.mxu0 0.0
        %273 = vmatpush.xpose.msra.mxu0 0.0
        %274 = vmatpush.xpose.msra.mxu0 0.0
        %275 = vmatpush.xpose.msra.mxu0 0.0
        %276 = vmatpush.xpose.msra.mxu0 0.0
        %277 = vmatpush.xpose.msra.mxu0 %v196
        %278 = vmatpush.xpose.msra.mxu0 %v192
        %279 = vmatpush.xpose.msra.mxu0 %v188
        %280 = vmatpush.xpose.msra.mxu0 %v184
        %281 = vmatmul.f32.gmra.mxu0 %v184
        %v282 = vpop.f32.mrf.mxu0
        %v283 = vadd.f32 %v254, %v282
        %284 = vmatmul.f32.gmra.mxu0 %v188
        %v285 = vpop.f32.mrf.mxu0
        %v286 = vadd.f32 %v257, %v285
        %287 = vmatmul.f32.gmra.mxu0 %v192
        %v288 = vpop.f32.mrf.mxu0
        %v289 = vadd.f32 %v260, %v288
        %290 = vmatmul.f32.gmra.mxu0 %v196
        %v291 = vpop.f32.mrf.mxu0
        %v292 = vadd.f32 %v263, %v291
        %293 = vdwg.mxu0
        %294 = vmatpush.xpose.msra.mxu0 0.0
        %295 = vmatpush.xpose.msra.mxu0 0.0
        %296 = vmatpush.xpose.msra.mxu0 0.0
        %297 = vmatpush.xpose.msra.mxu0 0.0
        %298 = vmatpush.xpose.msra.mxu0 0.0
        %299 = vmatpush.xpose.msra.mxu0 0.0
        %300 = vmatpush.xpose.msra.mxu0 0.0
        %301 = vmatpush.xpose.msra.mxu0 0.0
        %302 = vmatpush.xpose.msra.mxu0 0.0
        %303 = vmatpush.xpose.msra.mxu0 0.0
        %304 = vmatpush.xpose.msra.mxu0 0.0
        %305 = vmatpush.xpose.msra.mxu0 0.0
        %306 = vmatpush.xpose.msra.mxu0 %v197
        %307 = vmatpush.xpose.msra.mxu0 %v193
        %308 = vmatpush.xpose.msra.mxu0 %v189
        %309 = vmatpush.xpose.msra.mxu0 %v185
        %310 = vmatmul.f32.gmra.mxu0 %v185
        %v311 = vpop.f32.mrf.mxu0
        %v312 = vadd.f32 %v283, %v311
        %313 = vmatmul.f32.gmra.mxu0 %v189
        %v314 = vpop.f32.mrf.mxu0
        %v315 = vadd.f32 %v286, %v314
        %316 = vmatmul.f32.gmra.mxu0 %v193
        %v317 = vpop.f32.mrf.mxu0
        %v318 = vadd.f32 %v289, %v317
        %319 = vmatmul.f32.gmra.mxu0 %v197
        %v320 = vpop.f32.mrf.mxu0
        %v321 = vadd.f32 %v292, %v320
        %322 = vdwg.mxu0
        %323 = vmatpush.xpose.msra.mxu0 0.0
        %324 = vmatpush.xpose.msra.mxu0 0.0
        %325 = vmatpush.xpose.msra.mxu0 0.0
        %326 = vmatpush.xpose.msra.mxu0 0.0
        %327 = vmatpush.xpose.msra.mxu0 0.0
        %328 = vmatpush.xpose.msra.mxu0 0.0
        %329 = vmatpush.xpose.msra.mxu0 0.0
        %330 = vmatpush.xpose.msra.mxu0 0.0
        %331 = vmatpush.xpose.msra.mxu0 0.0
        %332 = vmatpush.xpose.msra.mxu0 0.0
        %333 = vmatpush.xpose.msra.mxu0 0.0
        %334 = vmatpush.xpose.msra.mxu0 0.0
        %335 = vmatpush.xpose.msra.mxu0 %v198
        %336 = vmatpush.xpose.msra.mxu0 %v194
        %337 = vmatpush.xpose.msra.mxu0 %v190
        %338 = vmatpush.xpose.msra.mxu0 %v186
        %339 = vmatmul.f32.gmra.mxu0 %v186
        %v340 = vpop.f32.mrf.mxu0
        %v341 = vadd.f32 %v312, %v340
        %342 = vmatmul.f32.gmra.mxu0 %v190
        %v343 = vpop.f32.mrf.mxu0
        %v344 = vadd.f32 %v315, %v343
        %345 = vmatmul.f32.gmra.mxu0 %v194
        %v346 = vpop.f32.mrf.mxu0
        %v347 = vadd.f32 %v318, %v346
        %348 = vmatmul.f32.gmra.mxu0 %v198
        %v349 = vpop.f32.mrf.mxu0
        %v350 = vadd.f32 %v321, %v349
        %351 = vdwg.mxu0
        %v352 = vadd.f32 %v232, %v341
        %v353 = vadd.f32 %v233, %v344
        %v354 = vadd.f32 %v234, %v347
        %v355 = vadd.f32 %v235, %v350
        %vm356 = vcmask 261120
        %357 = vst.msk [vmem:[#allocation5] sm:$0xff] %vm356, %v352
        %358 = vst.msk [vmem:[#allocation5 + $0x8] sm:$0xff] %vm356, %v353
        %359 = vst.msk [vmem:[#allocation5 + $0x10] sm:$0xff] %vm356, %v354
        %360 = vst.msk [vmem:[#allocation5 + $0x18] sm:$0xff] %vm356, %v355
        // Predicated region
        $region33: #{tpu_custom_call.1} parent=23 // pred_check
          %p361 = pneg %p71
        $region34: #{tpu_custom_call.1} parent=23 // pred_check_branch
          %363 = sbr.rel (%p361) target = $region36
        $region35: #{tpu_custom_call.1} parent=23 // pred_region
          _
        $region36: #{tpu_custom_call.1} parent=23 // pred_fallthru
          _
        // Predicated region
        $region37: #{tpu_custom_call.1} parent=23 // pred_check
          %p364 = pneg %p92
        $region38: #{tpu_custom_call.1} parent=23 // pred_check_branch
          %366 = sbr.rel (%p364) target = $region40
        $region39: #{tpu_custom_call.1} parent=23 // pred_region
          %368 = vsyncadd [#allocation4], 0
          %s369 = sshll.u32 [#allocation5], 4
          %s370 = int_to_ptr.vmem [resolvable:$true] %s369
          %s371 = sshll.u32 %s2, 4
          %s372 = int_to_ptr.hbm [resolvable:$true] %s371
          %377 = dma.vmem_to_hbm [thread:$0]  %s370, 512, %s372, [#allocation4], 128, 128, 8
        $region40: #{tpu_custom_call.1} parent=23 // pred_fallthru
          _
        // Predicated region
        $region41: #{tpu_custom_call.1} parent=23 // pred_check
          %p378 = pneg %p71
        $region42: #{tpu_custom_call.1} parent=23 // pred_check_branch
          %380 = sbr.rel (%p378) target = $region44
        $region43: #{tpu_custom_call.1} parent=23 // pred_region
          _
        $region44: #{tpu_custom_call.1} parent=23 // pred_fallthru
          _
        // Predicated region
        $region45: #{tpu_custom_call.1} parent=23 // pred_check
          %p381 = pneg %p92
        $region46: #{tpu_custom_call.1} parent=23 // pred_check_branch
          %383 = sbr.rel (%p381) target = $region48
        $region47: #{tpu_custom_call.1} parent=23 // pred_region
          %385 = dma.done [#allocation4], 512
        $region48: #{tpu_custom_call.1} parent=23 // pred_fallthru
          _
      $region24: #{tpu_custom_call.1} parent=5 // pred_fallthru
        _
      %p386 = scmp.le.s32.totalorder 2, %s13
      // Predicated region
      $region49: #{tpu_custom_call.1} parent=5 // pred_check
        %p387 = pneg %p386
      $region50: #{tpu_custom_call.1} parent=5 // pred_check_branch
        %389 = sbr.rel (%p387) target = $region52
      $region51: #{tpu_custom_call.1} parent=5 // pred_region
        %s390 = ssub.s32 %s13, 2
      $region52: #{tpu_custom_call.1} parent=5 // pred_fallthru
        _
    $region6: #{tpu_custom_call.1} parent=1 // loop_footer
      %s17 = sadd.s32 1, %s13
    $region7: #{tpu_custom_call.1} parent=1 // loop_footer_branch
      %12 = sbr.rel target = $region3
    $region8: #{tpu_custom_call.1} parent=1 // loop_exit
      _
    %391 = vsyncpa [#allocation3], 1
    %s392 = scalar_lea.sflag [#allocation3], 1
    %393 = vsyncpa %s392, 1
    %394 = vsyncpa [#allocation4], 1
    %s395 = scalar_lea.sflag [#allocation4], 1
    %396 = vsyncpa %s395, 1

</llo_original>
